<compile_context>
chip_gen: v5e
topology: v5e:2x2
jax: 0.10.0
libtpu: 0.0.40
codegen_flags: <defaults>
</compile_context>

<pallas_src>
import functools

import jax
import jax.numpy as jnp
from jax.experimental import pallas as pl
from jax.experimental.pallas import tpu as pltpu

_MAX_TILE = 512   # row / reduction tile upper bound (multiple of 128); fits all generations
_LANE = 128       # lane width: channel padding target


def _round_up(v, m):
    return ((v + m - 1) // m) * m


def _gcn_fused_kernel(a_ref, xc_ref, wt_ref, bt_ref, bg_ref,
                      z_ref, psum_ref, psq_ref, *, tile, n_valid):
    # Grid = (row tiles, K tiles).  Grid coordinates are read at the top level only; never
    # bind pl.program_id / pl.num_programs inside a pl.when body (no lowering in cond jaxpr).
    i = pl.program_id(0)
    k = pl.program_id(1)
    nk = pl.num_programs(1)

    @pl.when(k == 0)
    def _init():
        z_ref[...] = jnp.zeros_like(z_ref)

    # Fused temporal conv for this K tile: (tile, 3*Cin) @ (3*Cin, Cp) + bt.
    # Recomputed once per (row tile, K tile) -- ~5% extra MXU work, free while the pass is
    # A_hat-bandwidth bound, and it removes the whole xw HBM round trip.
    xw = (jnp.dot(xc_ref[...], wt_ref[...], preferred_element_type=jnp.float32)
          + bt_ref[...]).astype(a_ref.dtype)

    # GCN aggregation; accumulate directly into the resident f32 output block.
    z_ref[...] += jnp.dot(a_ref[...], xw, preferred_element_type=jnp.float32)

    @pl.when(k == nk - 1)
    def _finalize():
        z = z_ref[...] + bg_ref[...]
        z_ref[...] = z
        # Partial BatchNorm statistics for this row tile; rows beyond the real N
        # (grid zero-padding) are masked out of the statistics.
        row = i * tile + jax.lax.broadcasted_iota(jnp.int32, (tile, 1), 0)
        zm = jnp.where(row < n_valid, z, 0.0)
        s = jnp.sum(zm, axis=0, keepdims=True)          # (1, Cp)
        sq = jnp.sum(zm * zm, axis=0, keepdims=True)    # (1, Cp)
        psum_ref[...] = jnp.broadcast_to(s[:, None, :], psum_ref.shape)
        psq_ref[...] = jnp.broadcast_to(sq[:, None, :], psq_ref.shape)


def _bn_relu_kernel(z_ref, scale_ref, shift_ref, out_ref):
    # Pure elementwise normalize + affine + ReLU in f32 (keeps VPU math f32 on v5e too).
    out_ref[...] = jnp.maximum(
        z_ref[...] * scale_ref[...] + shift_ref[...], 0.0).astype(out_ref.dtype)


def stgcn_forward(x, edge_index, edge_weight, params, *, compute_dtype=jnp.bfloat16):
    """Forward of STGCNLayer.  x: (batch, seq_len, in_channels)."""
    B, L, Cin = x.shape
    wt, bt = params["wt"], params["bt"]          # (3, Cin, Cout), (1, Cout)
    wg, bg = params["wg"], params["bg"]          # (Cout, Cout),   (1, Cout)
    gamma, beta = params["gamma"], params["beta"]
    Cout = wt.shape[2]
    N = B * L

    Cp = _round_up(Cout, _LANE)
    tile = min(_MAX_TILE, _round_up(N, _LANE))   # multiple of 128 (rows & K)
    Np = _round_up(N, tile)
    n_row_tiles = Np // tile
    n_k_tiles = Np // tile
    # TODO(synk): on v7x (2 TensorCores) prefer an even n_row_tiles so both cores get rows.

    x = x.astype(jnp.float32)

    # --- im2col for the k=3, pad=1 temporal conv: (Np, 3*Cin) ---
    # Tap order [t-1, t, t+1] matches the (3, Cin, Cout) re-layout of the PyTorch
    # (Cout, Cin, 3) Conv1d weight.
    xpad = jnp.pad(x, ((0, 0), (1, 1), (0, 0)))
    xc = jnp.concatenate([xpad[:, k:k + L, :] for k in range(3)],
                         axis=-1).reshape(N, 3 * Cin)
    xc = jnp.pad(xc, ((0, Np - N), (0, 0))).astype(compute_dtype)

    # --- fold the GCN linear weight into the temporal conv weight (one MXU pass removed) ---
    wtf = wt.reshape(3 * Cin, Cout) @ wg                          # (3*Cin, Cout)
    btf = bt @ wg                                                 # (1, Cout) pre-A_hat bias
    wtf_p = jnp.pad(wtf, ((0, 0), (0, Cp - Cout))).astype(compute_dtype)
    btf_p = jnp.pad(btf, ((0, 0), (0, Cp - Cout))).astype(jnp.float32)
    bg_p = jnp.pad(bg, ((0, 0), (0, Cp - Cout))).astype(jnp.float32)
    gamma_p = jnp.pad(gamma, ((0, 0), (0, Cp - Cout))).astype(jnp.float32)
    beta_p = jnp.pad(beta, ((0, 0), (0, Cp - Cout))).astype(jnp.float32)

    # --- dense symmetrically-normalized adjacency with self loops (PyG gcn_norm) ---
    # Scattered directly into the pre-padded (Np, Np) buffer; normalization + cast fused.
    # TODO(synk): the scatter over edge_index has no clean Pallas equivalent and the dense
    # A_hat is O(N^2); for large graphs replace with a scalar-prefetched sparse/banded SpMM
    # and cache A_hat across calls when edge_index/edge_weight are static.
    src, dst = edge_index[0], edge_index[1]
    loop_idx = jnp.arange(N, dtype=edge_index.dtype)
    src_all = jnp.concatenate([src, loop_idx])
    dst_all = jnp.concatenate([dst, loop_idx])
    w_all = jnp.concatenate([edge_weight.astype(jnp.float32),
                             jnp.ones((N,), jnp.float32)])
    A = jnp.zeros((Np, Np), jnp.float32).at[dst_all, src_all].add(w_all)  # A[target, source]
    deg = A.sum(axis=1)
    dinv = jnp.where(deg > 0, jax.lax.rsqrt(deg), 0.0)
    a_hat = (dinv[:, None] * A * dinv[None, :]).astype(compute_dtype)

    # --- pass 1 (fused): temporal conv + A_hat @ (.) + bg, with partial BN statistics ---
    kernel = functools.partial(_gcn_fused_kernel, tile=tile, n_valid=N)
    z, psum, psq = pl.pallas_call(
        kernel,
        out_shape=(
            jax.ShapeDtypeStruct((Np, Cp), jnp.float32),
            jax.ShapeDtypeStruct((n_row_tiles, 8, Cp), jnp.float32),
            jax.ShapeDtypeStruct((n_row_tiles, 8, Cp), jnp.float32),
        ),
        grid=(n_row_tiles, n_k_tiles),
        in_specs=[
            pl.BlockSpec((tile, tile), lambda i, k: (i, k)),      # A_hat block (streamed)
            pl.BlockSpec((tile, 3 * Cin), lambda i, k: (k, 0)),   # im2col K-tile
            pl.BlockSpec((3 * Cin, Cp), lambda i, k: (0, 0)),     # folded conv+GCN weight
            pl.BlockSpec((1, Cp), lambda i, k: (0, 0)),           # folded conv bias
            pl.BlockSpec((1, Cp), lambda i, k: (0, 0)),           # GCN bias
        ],
        out_specs=(
            pl.BlockSpec((tile, Cp), lambda i, k: (i, 0)),        # z (resident accumulator)
            pl.BlockSpec((1, 8, Cp), lambda i, k: (i, 0, 0)),
            pl.BlockSpec((1, 8, Cp), lambda i, k: (i, 0, 0)),
        ),
        compiler_params=pltpu.CompilerParams(
            dimension_semantics=("parallel", "arbitrary")),
    )(a_hat, xc, wtf_p, btf_p, bg_p)

    # --- tiny cross-tile reduction + BN scale/shift (train-mode biased stats, eps=1e-5) ---
    # TODO(synk): running_mean/running_var side effect of nn.BatchNorm1d is not produced;
    # E[z^2]-mean^2 in f32 may cancel for very large N -- use a shifted combination then.
    total = psum[:, 0, :].sum(axis=0)                 # (Cp,)
    total_sq = psq[:, 0, :].sum(axis=0)
    mean = total / N
    var = jnp.maximum(total_sq / N - mean * mean, 0.0)           # biased variance
    scale = (gamma_p[0] * jax.lax.rsqrt(var + 1e-5))[None, :]    # (1, Cp)
    shift = (beta_p[0] - mean * scale[0])[None, :]               # (1, Cp)

    # --- pass 2: normalize + affine + ReLU (elementwise, lane-dense stores) ---
    out = pl.pallas_call(
        _bn_relu_kernel,
        out_shape=jax.ShapeDtypeStruct((Np, Cp), jnp.float32),
        grid=(n_row_tiles,),
        in_specs=[
            pl.BlockSpec((tile, Cp), lambda i: (i, 0)),
            pl.BlockSpec((1, Cp), lambda i: (0, 0)),
            pl.BlockSpec((1, Cp), lambda i: (0, 0)),
        ],
        out_specs=pl.BlockSpec((tile, Cp), lambda i: (i, 0)),
        compiler_params=pltpu.CompilerParams(dimension_semantics=("parallel",)),
    )(z, scale, shift)

    return out[:N, :Cout].reshape(B, L, Cout)


def init_params(key, in_channels, out_channels):
    k1, k2, k3, k4 = jax.random.split(key, 4)
    # temporal conv weight stored as (k=3, Cin, Cout)  (PyTorch stores (Cout, Cin, 3))
    wt = jax.random.normal(k1, (3, in_channels, out_channels), jnp.float32) * 0.2
    bt = jax.random.normal(k2, (1, out_channels), jnp.float32) * 0.1
    # GCN linear weight, applied as h @ wg (i.e. wg = lin.weight.T in PyG terms)
    wg = jax.random.normal(k3, (out_channels, out_channels), jnp.float32) * 0.2
    bg = jax.random.normal(k4, (1, out_channels), jnp.float32) * 0.1
    # BatchNorm1d default init: gamma=1, beta=0
    gamma = jnp.ones((1, out_channels), jnp.float32)
    beta = jnp.zeros((1, out_channels), jnp.float32)
    return dict(wt=wt, bt=bt, wg=wg, bg=bg, gamma=gamma, beta=beta)


if __name__ == "__main__":
    B, L, Cin, Cout = 2, 8, 4, 32
    N = B * L

    key = jax.random.PRNGKey(0)
    kx, kp, kw = jax.random.split(key, 3)

    x = jax.random.normal(kx, (B, L, Cin), jnp.float32)

    # deterministic bidirectional ring graph over the B*L flattened nodes
    i = jnp.arange(N, dtype=jnp.int32)
    src = jnp.concatenate([i, (i + 1) % N])
    dst = jnp.concatenate([(i + 1) % N, i])
    edge_index = jnp.stack([src, dst])                       # (2, 2N)
    edge_weight = jax.random.uniform(kw, (2 * N,), jnp.float32, 0.5, 1.5)

    params = init_params(kp, Cin, Cout)

    y = stgcn_forward(x, edge_index, edge_weight, params)
    jax.block_until_ready(y)
    assert y.shape == (B, L, Cout)
    print("KERNEL_OK")
</pallas_src>

<mosaic_0001>
module attributes {stable_mosaic.version = 11 : i64} {
  func.func @_gcn_fused_kernel(%arg0: i32, %arg1: i32, %arg2: memref<128x128xbf16, #tpu.memory_space<vmem>>, %arg3: memref<128x12xbf16, #tpu.memory_space<vmem>>, %arg4: memref<12x128xbf16, #tpu.memory_space<vmem>>, %arg5: memref<1x128xf32, #tpu.memory_space<vmem>>, %arg6: memref<1x128xf32, #tpu.memory_space<vmem>>, %arg7: memref<128x128xf32, #tpu.memory_space<vmem>>, %arg8: memref<1x8x128xf32, #tpu.memory_space<vmem>>, %arg9: memref<1x8x128xf32, #tpu.memory_space<vmem>>) attributes {dimension_semantics = [#tpu.dimension_semantics<parallel>, #tpu.dimension_semantics<arbitrary>], iteration_bounds = array<i64: 1, 1>, scalar_prefetch = 0 : i64, scratch_operands = 0 : i64, tpu.core_type = #tpu.core_type<tc>, window_params = [{transform_indices = @transform_0, window_bounds = array<i64: 128, 128>}, {transform_indices = @transform_1, window_bounds = array<i64: 128, 12>}, {pipeline_mode = #tpu.pipeline_mode<synchronous>, transform_indices = @transform_2, window_bounds = array<i64: 12, 128>}, {pipeline_mode = #tpu.pipeline_mode<synchronous>, transform_indices = @transform_3, window_bounds = array<i64: 1, 128>}, {pipeline_mode = #tpu.pipeline_mode<synchronous>, transform_indices = @transform_4, window_bounds = array<i64: 1, 128>}, {transform_indices = @transform_5, window_bounds = array<i64: 128, 128>}, {transform_indices = @transform_6, window_bounds = array<i64: 1, 8, 128>}, {transform_indices = @transform_7, window_bounds = array<i64: 1, 8, 128>}]} {
    %c0_i32 = arith.constant 0 : i32
    %0 = arith.cmpi eq, %arg1, %c0_i32 : i32
    %1 = arith.extui %0 : i1 to i32
    %c0_i32_0 = arith.constant 0 : i32
    %2 = arith.cmpi ne, %1, %c0_i32_0 : i32
    scf.if %2 {
      %cst_15 = arith.constant 0.000000e+00 : f32
      %18 = vector.broadcast %cst_15 : f32 to vector<128x128xf32>
      %c0_16 = arith.constant 0 : index
      %c0_17 = arith.constant 0 : index
      %19 = vector.load %arg7[%c0_16, %c0_17] : memref<128x128xf32, #tpu.memory_space<vmem>>, vector<128x128xf32>
      tpu.vector_store %arg7[%c0_16, %c0_17], %18 {strides = array<i32>} : memref<128x128xf32, #tpu.memory_space<vmem>>, vector<128x128xf32>,
    } else {
    }
    %c0 = arith.constant 0 : index
    %c0_1 = arith.constant 0 : index
    %3 = vector.load %arg3[%c0, %c0_1] : memref<128x12xbf16, #tpu.memory_space<vmem>>, vector<128x12xbf16>
    %c0_2 = arith.constant 0 : index
    %c0_3 = arith.constant 0 : index
    %4 = vector.load %arg4[%c0_2, %c0_3] : memref<12x128xbf16, #tpu.memory_space<vmem>>, vector<12x128xbf16>
    %cst = arith.constant dense<0.000000e+00> : vector<128x128xf32>
    %5 = tpu.matmul %3, %4, %cst {dimension_numbers = #tpu.dot_dimension_numbers<[1], [0], [0], [1], [0, 0, 1, 1], [], []>} : vector<128x12xbf16>, vector<12x128xbf16>, vector<128x128xf32> -> vector<128x128xf32>
    %c0_4 = arith.constant 0 : index
    %c0_5 = arith.constant 0 : index
    %6 = vector.load %arg5[%c0_4, %c0_5] : memref<1x128xf32, #tpu.memory_space<vmem>>, vector<1x128xf32>
    %7 = vector.broadcast %6 : vector<1x128xf32> to vector<128x128xf32>
    %8 = arith.addf %5, %7 : vector<128x128xf32>
    %9 = arith.truncf %8 : vector<128x128xf32> to vector<128x128xbf16>
    %c0_6 = arith.constant 0 : index
    %c0_7 = arith.constant 0 : index
    %10 = vector.load %arg7[%c0_6, %c0_7] : memref<128x128xf32, #tpu.memory_space<vmem>>, vector<128x128xf32>
    %c0_8 = arith.constant 0 : index
    %c0_9 = arith.constant 0 : index
    %11 = vector.load %arg2[%c0_8, %c0_9] : memref<128x128xbf16, #tpu.memory_space<vmem>>, vector<128x128xbf16>
    %cst_10 = arith.constant dense<0.000000e+00> : vector<128x128xf32>
    %12 = tpu.matmul %11, %9, %cst_10 {dimension_numbers = #tpu.dot_dimension_numbers<[1], [0], [0], [1], [0, 0, 1, 1], [], []>} : vector<128x128xbf16>, vector<128x128xbf16>, vector<128x128xf32> -> vector<128x128xf32>
    %13 = arith.addf %10, %12 : vector<128x128xf32>
    %c0_11 = arith.constant 0 : index
    %c0_12 = arith.constant 0 : index
    %14 = vector.load %arg7[%c0_11, %c0_12] : memref<128x128xf32, #tpu.memory_space<vmem>>, vector<128x128xf32>
    tpu.vector_store %arg7[%c0_11, %c0_12], %13 {strides = array<i32>} : memref<128x128xf32, #tpu.memory_space<vmem>>, vector<128x128xf32>,
    %c0_i32_13 = arith.constant 0 : i32
    %15 = arith.cmpi eq, %arg1, %c0_i32_13 : i32
    %16 = arith.extui %15 : i1 to i32
    %c0_i32_14 = arith.constant 0 : i32
    %17 = arith.cmpi ne, %16, %c0_i32_14 : i32
    scf.if %17 {
      %c0_15 = arith.constant 0 : index
      %c0_16 = arith.constant 0 : index
      %18 = vector.load %arg7[%c0_15, %c0_16] : memref<128x128xf32, #tpu.memory_space<vmem>>, vector<128x128xf32>
      %c0_17 = arith.constant 0 : index
      %c0_18 = arith.constant 0 : index
      %19 = vector.load %arg6[%c0_17, %c0_18] : memref<1x128xf32, #tpu.memory_space<vmem>>, vector<1x128xf32>
      %20 = vector.broadcast %19 : vector<1x128xf32> to vector<128x128xf32>
      %21 = arith.addf %18, %20 : vector<128x128xf32>
      %c0_19 = arith.constant 0 : index
      %c0_20 = arith.constant 0 : index
      %22 = vector.load %arg7[%c0_19, %c0_20] : memref<128x128xf32, #tpu.memory_space<vmem>>, vector<128x128xf32>
      tpu.vector_store %arg7[%c0_19, %c0_20], %21 {strides = array<i32>} : memref<128x128xf32, #tpu.memory_space<vmem>>, vector<128x128xf32>,
      %c128_i32 = arith.constant 128 : i32
      %23 = arith.muli %arg0, %c128_i32 : i32
      %24 = tpu.iota {dimensions = array<i32: 0>} : vector<128x1xi32>
      %25 = vector.broadcast %23 : i32 to vector<128x1xi32>
      %26 = arith.addi %25, %24 : vector<128x1xi32>
      %c16_i32 = arith.constant 16 : i32
      %27 = vector.broadcast %c16_i32 : i32 to vector<128x1xi32>
      %28 = arith.cmpi slt, %26, %27 : vector<128x1xi32>
      %cst_21 = arith.constant 0.000000e+00 : f32
      %29 = vector.shape_cast %28 : vector<128x1xi1> to vector<128x1xi1>
      %30 = vector.broadcast %29 : vector<128x1xi1> to vector<128x128xi1>
      %31 = vector.broadcast %cst_21 : f32 to vector<128x128xf32>
      %32 = arith.select %30, %21, %31 : vector<128x128xi1>, vector<128x128xf32>
      %cst_22 = arith.constant dense<0.000000e+00> : vector<128xf32>
      %33 = vector.multi_reduction <add>, %32, %cst_22 [0] : vector<128x128xf32> to vector<128xf32>
      %34 = vector.shape_cast %33 : vector<128xf32> to vector<1x128xf32>
      %35 = arith.mulf %32, %32 : vector<128x128xf32>
      %cst_23 = arith.constant dense<0.000000e+00> : vector<128xf32>
      %36 = vector.multi_reduction <add>, %35, %cst_23 [0] : vector<128x128xf32> to vector<128xf32>
      %37 = vector.shape_cast %36 : vector<128xf32> to vector<1x128xf32>
      %38 = vector.shape_cast %34 : vector<1x128xf32> to vector<1x1x128xf32>
      %39 = vector.shape_cast %38 : vector<1x1x128xf32> to vector<1x1x128xf32>
      %40 = vector.broadcast %39 : vector<1x1x128xf32> to vector<1x8x128xf32>
      %c0_24 = arith.constant 0 : index
      %c0_25 = arith.constant 0 : index
      %c0_26 = arith.constant 0 : index
      %41 = vector.load %arg8[%c0_24, %c0_25, %c0_26] : memref<1x8x128xf32, #tpu.memory_space<vmem>>, vector<1x8x128xf32>
      tpu.vector_store %arg8[%c0_24, %c0_25, %c0_26], %40 {strides = array<i32>} : memref<1x8x128xf32, #tpu.memory_space<vmem>>, vector<1x8x128xf32>,
      %42 = vector.shape_cast %37 : vector<1x128xf32> to vector<1x1x128xf32>
      %43 = vector.shape_cast %42 : vector<1x1x128xf32> to vector<1x1x128xf32>
      %44 = vector.broadcast %43 : vector<1x1x128xf32> to vector<1x8x128xf32>
      %c0_27 = arith.constant 0 : index
      %c0_28 = arith.constant 0 : index
      %c0_29 = arith.constant 0 : index
      %45 = vector.load %arg9[%c0_27, %c0_28, %c0_29] : memref<1x8x128xf32, #tpu.memory_space<vmem>>, vector<1x8x128xf32>
      tpu.vector_store %arg9[%c0_27, %c0_28, %c0_29], %44 {strides = array<i32>} : memref<1x8x128xf32, #tpu.memory_space<vmem>>, vector<1x8x128xf32>,
    } else {
    }
    return
  }
  func.func @transform_0(%arg0: i32, %arg1: i32) -> (i32, i32) {
    %c0_i32 = arith.constant 0 : i32
    return %arg0, %arg1 : i32, i32
  }
  func.func @transform_1(%arg0: i32, %arg1: i32) -> (i32, i32) {
    %c0_i32 = arith.constant 0 : i32
    %c0_i32_0 = arith.constant 0 : i32
    return %arg1, %c0_i32 : i32, i32
  }
  func.func @transform_2(%arg0: i32, %arg1: i32) -> (i32, i32) {
    %c0_i32 = arith.constant 0 : i32
    %c0_i32_0 = arith.constant 0 : i32
    %c0_i32_1 = arith.constant 0 : i32
    return %c0_i32, %c0_i32_0 : i32, i32
  }
  func.func @transform_3(%arg0: i32, %arg1: i32) -> (i32, i32) {
    %c0_i32 = arith.constant 0 : i32
    %c0_i32_0 = arith.constant 0 : i32
    %c0_i32_1 = arith.constant 0 : i32
    return %c0_i32, %c0_i32_0 : i32, i32
  }
  func.func @transform_4(%arg0: i32, %arg1: i32) -> (i32, i32) {
    %c0_i32 = arith.constant 0 : i32
    %c0_i32_0 = arith.constant 0 : i32
    %c0_i32_1 = arith.constant 0 : i32
    return %c0_i32, %c0_i32_0 : i32, i32
  }
  func.func @transform_5(%arg0: i32, %arg1: i32) -> (i32, i32) {
    %c0_i32 = arith.constant 0 : i32
    %c0_i32_0 = arith.constant 0 : i32
    return %arg0, %c0_i32 : i32, i32
  }
  func.func @transform_6(%arg0: i32, %arg1: i32) -> (i32, i32, i32) {
    %c0_i32 = arith.constant 0 : i32
    %c0_i32_0 = arith.constant 0 : i32
    %c0_i32_1 = arith.constant 0 : i32
    return %arg0, %c0_i32, %c0_i32_0 : i32, i32, i32
  }
  func.func @transform_7(%arg0: i32, %arg1: i32) -> (i32, i32, i32) {
    %c0_i32 = arith.constant 0 : i32
    %c0_i32_0 = arith.constant 0 : i32
    %c0_i32_1 = arith.constant 0 : i32
    return %arg0, %c0_i32, %c0_i32_0 : i32, i32, i32
  }
}

</mosaic_0001>

<llo_original>
// kernel: tpu_custom_call.1
$region0: #{tpu_custom_call.1}
  #allocation0 [shape = 'u32[]', space=smem, size = 0x4, offset = 0x4, fixed_abs, tag = 'smem constant byte address 0x4 - core index']
  #allocation1 [shape = 'u32[72,128]{1,0:T(1,128)}', space=vmem, size = 0x9000, scoped, tag = 'internal scratch']
  %s0 = inlined_call_operand.vmem [shape: bf16[128,128], index: 0, kind: input, shape index: {}]
  %s1 = inlined_call_operand.vmem [shape: bf16[128,12], index: 1, kind: input, shape index: {}]
  %s2 = inlined_call_operand.vmem [shape: bf16[12,128], index: 2, kind: input, shape index: {}]
  %s3 = inlined_call_operand.vmem [shape: f32[1,128], index: 3, kind: input, shape index: {}]
  %s4 = inlined_call_operand.vmem [shape: f32[1,128], index: 4, kind: input, shape index: {}]
  %s5 = inlined_call_operand.hbm [shape: f32[128,128], index: 5, kind: output, shape index: {0}]
  %s6 = inlined_call_operand.hbm [shape: f32[1,8,128], index: 6, kind: output, shape index: {1}]
  %s7 = inlined_call_operand.hbm [shape: f32[1,8,128], index: 7, kind: output, shape index: {2}]
  %8 = xla_tuple %s5, %s6, %s7
  %s9 = sld [smem:[#allocation0]]
  $region54: #{tpu_custom_call.1} parent=0
    _
  %s11 = ssub.s32 1, %s9
  %s12 = scalar_select 0, %s11, %s9
  $region1: #{tpu_custom_call.1} parent=0
    #allocation2 [shape = 'u8[65536]{0}', space=vmem, size = 0x10000, scoped, tag = 'output window, operand 0, single buffered']
    #allocation3 [shape = 's32[1]{0}', space=sflag, size = 0x4, scoped, tag = 'scoped memory for tpu_custom_call.1']
    #allocation4 [shape = 'u8[4096]{0}', space=vmem, size = 0x1000, scoped, tag = 'output window, operand 1, single buffered']
    #allocation5 [shape = 's32[1]{0}', space=sflag, size = 0x4, scoped, tag = 'scoped memory for tpu_custom_call.1']
    #allocation6 [shape = 'u8[4096]{0}', space=vmem, size = 0x1000, scoped, tag = 'output window, operand 2, single buffered']
    %13 = vsyncpa [#allocation3], 0
    %14 = vsyncpa [#allocation5], 0
    // Predicated region
    $region2: #{tpu_custom_call.1} parent=1 // pred_check
      _
    $region3: #{tpu_custom_call.1} parent=1 // pred_check_branch
      %16 = sbr.rel (0) target = $region5
    $region4: #{tpu_custom_call.1} parent=1 // pred_region
      _
    $region5: #{tpu_custom_call.1} parent=1 // pred_fallthru
      _
    // Predicated region
    $region6: #{tpu_custom_call.1} parent=1 // pred_check
      _
    $region7: #{tpu_custom_call.1} parent=1 // pred_check_branch
      %18 = sbr.rel (0) target = $region9
    $region8: #{tpu_custom_call.1} parent=1 // pred_region
      _
    $region9: #{tpu_custom_call.1} parent=1 // pred_fallthru
      _
    // Predicated region
    $region10: #{tpu_custom_call.1} parent=1 // pred_check
      _
    $region11: #{tpu_custom_call.1} parent=1 // pred_check_branch
      %20 = sbr.rel (0) target = $region13
    $region12: #{tpu_custom_call.1} parent=1 // pred_region
      _
    $region13: #{tpu_custom_call.1} parent=1 // pred_fallthru
      _
    // Predicated region
    $region14: #{tpu_custom_call.1} parent=1 // pred_check
      _
    $region15: #{tpu_custom_call.1} parent=1 // pred_check_branch
      %22 = sbr.rel (0) target = $region17
    $region16: #{tpu_custom_call.1} parent=1 // pred_region
      _
    $region17: #{tpu_custom_call.1} parent=1 // pred_fallthru
      _
    // Predicated region
    $region18: #{tpu_custom_call.1} parent=1 // pred_check
      _
    $region19: #{tpu_custom_call.1} parent=1 // pred_check_branch
      %24 = sbr.rel (0) target = $region21
    $region20: #{tpu_custom_call.1} parent=1 // pred_region
      _
    $region21: #{tpu_custom_call.1} parent=1 // pred_fallthru
      _
    %p26 = scmp.eq.s32.totalorder 0, 0
    // Predicated region
    $region22: #{tpu_custom_call.1} parent=1 // pred_check
      %p27 = pneg %p26
    $region23: #{tpu_custom_call.1} parent=1 // pred_check_branch
      %29 = sbr.rel (%p27) target = $region25
    $region24: #{tpu_custom_call.1} parent=1 // pred_region
      %30 = vst [vmem:[#allocation2] sm:$0xff] 0.0
      %31 = vst [vmem:[#allocation2 + $0x8] sm:$0xff] 0.0
      %32 = vst [vmem:[#allocation2 + $0x10] sm:$0xff] 0.0
      %33 = vst [vmem:[#allocation2 + $0x18] sm:$0xff] 0.0
      %34 = vst [vmem:[#allocation2 + $0x20] sm:$0xff] 0.0
      %35 = vst [vmem:[#allocation2 + $0x28] sm:$0xff] 0.0
      %36 = vst [vmem:[#allocation2 + $0x30] sm:$0xff] 0.0
      %37 = vst [vmem:[#allocation2 + $0x38] sm:$0xff] 0.0
      %38 = vst [vmem:[#allocation2 + $0x40] sm:$0xff] 0.0
      %39 = vst [vmem:[#allocation2 + $0x48] sm:$0xff] 0.0
      %40 = vst [vmem:[#allocation2 + $0x50] sm:$0xff] 0.0
      %41 = vst [vmem:[#allocation2 + $0x58] sm:$0xff] 0.0
      %42 = vst [vmem:[#allocation2 + $0x60] sm:$0xff] 0.0
      %43 = vst [vmem:[#allocation2 + $0x68] sm:$0xff] 0.0
      %44 = vst [vmem:[#allocation2 + $0x70] sm:$0xff] 0.0
      %45 = vst [vmem:[#allocation2 + $0x78] sm:$0xff] 0.0
    $region25: #{tpu_custom_call.1} parent=1 // pred_fallthru
      _
    %v46 = vld [vmem:[%s1] sm:$0xf]
    %v47 = vld [vmem:[%s1 + $0x4] sm:$0xf]
    %v48 = vld [vmem:[%s1 + $0x8] sm:$0xf]
    %v49 = vld [vmem:[%s1 + $0xc] sm:$0xf]
    %v50 = vld [vmem:[%s1 + $0x10] sm:$0xf]
    %v51 = vld [vmem:[%s1 + $0x14] sm:$0xf]
    %v52 = vld [vmem:[%s1 + $0x18] sm:$0xf]
    %v53 = vld [vmem:[%s1 + $0x1c] sm:$0xf]
    %v54 = vld [vmem:[%s1 + $0x20] sm:$0xf]
    %v55 = vld [vmem:[%s1 + $0x24] sm:$0xf]
    %v56 = vld [vmem:[%s1 + $0x28] sm:$0xf]
    %v57 = vld [vmem:[%s1 + $0x2c] sm:$0xf]
    %v58 = vld [vmem:[%s1 + $0x30] sm:$0xf]
    %v59 = vld [vmem:[%s1 + $0x34] sm:$0xf]
    %v60 = vld [vmem:[%s1 + $0x38] sm:$0xf]
    %v61 = vld [vmem:[%s1 + $0x3c] sm:$0xf]
    %v62 = vld [vmem:[%s2] sm:$0xf]
    %v63 = vld [vmem:[%s2 + $0x4] sm:$0x3]
    %v64 = vld [vmem:[%s3] sm:$0x1]
    %v66 = vperm.slane %v64, 0
    %v84 = vunpack.c.l.b16 %v46
    %v85 = vunpack.c.l.b16 %v47
    %v86 = vunpack.c.l.b16 %v48
    %v87 = vunpack.c.l.b16 %v49
    %v88 = vunpack.c.l.b16 %v50
    %v89 = vunpack.c.l.b16 %v51
    %v90 = vunpack.c.l.b16 %v52
    %v91 = vunpack.c.l.b16 %v53
    %v92 = vunpack.c.l.b16 %v54
    %v93 = vunpack.c.l.b16 %v55
    %v94 = vunpack.c.l.b16 %v56
    %v95 = vunpack.c.l.b16 %v57
    %v96 = vunpack.c.l.b16 %v58
    %v97 = vunpack.c.l.b16 %v59
    %v98 = vunpack.c.l.b16 %v60
    %v99 = vunpack.c.l.b16 %v61
    %v100 = vpack.c.b16 %v85, %v84
    %v101 = vpack.c.b16 %v87, %v86
    %v102 = vpack.c.b16 %v89, %v88
    %v103 = vpack.c.b16 %v91, %v90
    %v104 = vpack.c.b16 %v93, %v92
    %v105 = vpack.c.b16 %v95, %v94
    %v106 = vpack.c.b16 %v97, %v96
    %v107 = vpack.c.b16 %v99, %v98
    %v110 = vunpack.c.l.b16 %v62
    %v111 = vunpack.c.l.b16 %v63
    %v112 = vpack.c.b16 %v111, %v110
    %vm113 = vcmask 97280
    %v115 = vsel %vm113, %v100, 0
    %v118 = vsel %vm113, %v101, 0
    %v121 = vsel %vm113, %v102, 0
    %v124 = vsel %vm113, %v103, 0
    %v127 = vsel %vm113, %v104, 0
    %v130 = vsel %vm113, %v105, 0
    %v133 = vsel %vm113, %v106, 0
    %v136 = vsel %vm113, %v107, 0
    %vm138 = vcmask 1045504
    %v140 = vsel %vm138, %v112, 0
    %142 = vmatpush.bf16.msra.mxu0 0
    %143 = vmatpush.bf16.msra.mxu0 0
    %144 = vmatpush.bf16.msra.mxu0 0
    %145 = vmatpush.bf16.msra.mxu0 0
    %146 = vmatpush.bf16.msra.mxu0 0
    %147 = vmatpush.bf16.msra.mxu0 0
    %148 = vmatpush.bf16.msra.mxu0 0
    %149 = vmatpush.bf16.msra.mxu0 %v140
    %150 = vmatmul.bf16.gmra.mxu0 %v115
    %v151 = vpop.f32.mrf.mxu0
    %v152 = vadd.f32 %v66, %v151
    %v153 = vpop.f32.mrf.mxu0
    %v154 = vadd.f32 %v66, %v153
    %155 = vmatmul.bf16.gmra.mxu0 %v118
    %v156 = vpop.f32.mrf.mxu0
    %v157 = vadd.f32 %v66, %v156
    %v158 = vpop.f32.mrf.mxu0
    %v159 = vadd.f32 %v66, %v158
    %160 = vmatmul.bf16.gmra.mxu0 %v121
    %v161 = vpop.f32.mrf.mxu0
    %v162 = vadd.f32 %v66, %v161
    %v163 = vpop.f32.mrf.mxu0
    %v164 = vadd.f32 %v66, %v163
    %165 = vmatmul.bf16.gmra.mxu0 %v124
    %v166 = vpop.f32.mrf.mxu0
    %v167 = vadd.f32 %v66, %v166
    %v168 = vpop.f32.mrf.mxu0
    %v169 = vadd.f32 %v66, %v168
    %170 = vmatmul.bf16.gmra.mxu0 %v127
    %v171 = vpop.f32.mrf.mxu0
    %v172 = vadd.f32 %v66, %v171
    %v173 = vpop.f32.mrf.mxu0
    %v174 = vadd.f32 %v66, %v173
    %175 = vmatmul.bf16.gmra.mxu0 %v130
    %v176 = vpop.f32.mrf.mxu0
    %v177 = vadd.f32 %v66, %v176
    %v178 = vpop.f32.mrf.mxu0
    %v179 = vadd.f32 %v66, %v178
    %180 = vmatmul.bf16.gmra.mxu0 %v133
    %v181 = vpop.f32.mrf.mxu0
    %v182 = vadd.f32 %v66, %v181
    %v183 = vpop.f32.mrf.mxu0
    %v184 = vadd.f32 %v66, %v183
    %185 = vmatmul.bf16.gmra.mxu0 %v136
    %v186 = vpop.f32.mrf.mxu0
    %v187 = vadd.f32 %v66, %v186
    %v188 = vpop.f32.mrf.mxu0
    %v189 = vadd.f32 %v66, %v188
    %190 = vdwg.mxu0
    %v191 = vpack.c.bf16 %v154, %v152
    %v192 = vpack.c.bf16 %v159, %v157
    %v193 = vpack.c.bf16 %v164, %v162
    %v194 = vpack.c.bf16 %v169, %v167
    %v195 = vpack.c.bf16 %v174, %v172
    %v196 = vpack.c.bf16 %v179, %v177
    %v197 = vpack.c.bf16 %v184, %v182
    %v198 = vpack.c.bf16 %v189, %v187
    %v199 = vld [vmem:[#allocation2] sm:$0xff]
    %v200 = vld [vmem:[#allocation2 + $0x8] sm:$0xff]
    %v201 = vld [vmem:[#allocation2 + $0x10] sm:$0xff]
    %v202 = vld [vmem:[#allocation2 + $0x18] sm:$0xff]
    %v203 = vld [vmem:[#allocation2 + $0x20] sm:$0xff]
    %v204 = vld [vmem:[#allocation2 + $0x28] sm:$0xff]
    %v205 = vld [vmem:[#allocation2 + $0x30] sm:$0xff]
    %v206 = vld [vmem:[#allocation2 + $0x38] sm:$0xff]
    %v207 = vld [vmem:[#allocation2 + $0x40] sm:$0xff]
    %v208 = vld [vmem:[#allocation2 + $0x48] sm:$0xff]
    %v209 = vld [vmem:[#allocation2 + $0x50] sm:$0xff]
    %v210 = vld [vmem:[#allocation2 + $0x58] sm:$0xff]
    %v211 = vld [vmem:[#allocation2 + $0x60] sm:$0xff]
    %v212 = vld [vmem:[#allocation2 + $0x68] sm:$0xff]
    %v213 = vld [vmem:[#allocation2 + $0x70] sm:$0xff]
    %v214 = vld [vmem:[#allocation2 + $0x78] sm:$0xff]
    %v215 = vld [vmem:[%s0] sm:$0xf]
    %v216 = vld [vmem:[%s0 + $0x4] sm:$0xf]
    %v217 = vld [vmem:[%s0 + $0x8] sm:$0xf]
    %v218 = vld [vmem:[%s0 + $0xc] sm:$0xf]
    %v219 = vld [vmem:[%s0 + $0x10] sm:$0xf]
    %v220 = vld [vmem:[%s0 + $0x14] sm:$0xf]
    %v221 = vld [vmem:[%s0 + $0x18] sm:$0xf]
    %v222 = vld [vmem:[%s0 + $0x1c] sm:$0xf]
    %v223 = vld [vmem:[%s0 + $0x20] sm:$0xf]
    %v224 = vld [vmem:[%s0 + $0x24] sm:$0xf]
    %v225 = vld [vmem:[%s0 + $0x28] sm:$0xf]
    %v226 = vld [vmem:[%s0 + $0x2c] sm:$0xf]
    %v227 = vld [vmem:[%s0 + $0x30] sm:$0xf]
    %v228 = vld [vmem:[%s0 + $0x34] sm:$0xf]
    %v229 = vld [vmem:[%s0 + $0x38] sm:$0xf]
    %v230 = vld [vmem:[%s0 + $0x3c] sm:$0xf]
    %v247 = vunpack.c.l.b16 %v215
    %v248 = vunpack.c.l.b16 %v216
    %v249 = vunpack.c.l.b16 %v217
    %v250 = vunpack.c.l.b16 %v218
    %v251 = vunpack.c.l.b16 %v219
    %v252 = vunpack.c.l.b16 %v220
    %v253 = vunpack.c.l.b16 %v221
    %v254 = vunpack.c.l.b16 %v222
    %v255 = vunpack.c.l.b16 %v223
    %v256 = vunpack.c.l.b16 %v224
    %v257 = vunpack.c.l.b16 %v225
    %v258 = vunpack.c.l.b16 %v226
    %v259 = vunpack.c.l.b16 %v227
    %v260 = vunpack.c.l.b16 %v228
    %v261 = vunpack.c.l.b16 %v229
    %v262 = vunpack.c.l.b16 %v230
    %v263 = vpack.c.b16 %v248, %v247
    %v264 = vpack.c.b16 %v250, %v249
    %v265 = vpack.c.b16 %v252, %v251
    %v266 = vpack.c.b16 %v254, %v253
    %v267 = vpack.c.b16 %v256, %v255
    %v268 = vpack.c.b16 %v258, %v257
    %v269 = vpack.c.b16 %v260, %v259
    %v270 = vpack.c.b16 %v262, %v261
    %279 = vmatpush.bf16.msra.mxu0 %v198
    %280 = vmatpush.bf16.msra.mxu0 %v197
    %281 = vmatpush.bf16.msra.mxu0 %v196
    %282 = vmatpush.bf16.msra.mxu0 %v195
    %283 = vmatpush.bf16.msra.mxu0 %v194
    %284 = vmatpush.bf16.msra.mxu0 %v193
    %285 = vmatpush.bf16.msra.mxu0 %v192
    %286 = vmatpush.bf16.msra.mxu0 %v191
    %287 = vmatmul.bf16.gmra.mxu0 %v263
    %v288 = vpop.f32.mrf.mxu0
    %v289 = vadd.f32 0.0, %v288
    %v290 = vpop.f32.mrf.mxu0
    %v291 = vadd.f32 0.0, %v290
    %292 = vmatmul.bf16.gmra.mxu0 %v264
    %v293 = vpop.f32.mrf.mxu0
    %v294 = vadd.f32 0.0, %v293
    %v295 = vpop.f32.mrf.mxu0
    %v296 = vadd.f32 0.0, %v295
    %297 = vmatmul.bf16.gmra.mxu0 %v265
    %v298 = vpop.f32.mrf.mxu0
    %v299 = vadd.f32 0.0, %v298
    %v300 = vpop.f32.mrf.mxu0
    %v301 = vadd.f32 0.0, %v300
    %302 = vmatmul.bf16.gmra.mxu0 %v266
    %v303 = vpop.f32.mrf.mxu0
    %v304 = vadd.f32 0.0, %v303
    %v305 = vpop.f32.mrf.mxu0
    %v306 = vadd.f32 0.0, %v305
    %307 = vmatmul.bf16.gmra.mxu0 %v267
    %v308 = vpop.f32.mrf.mxu0
    %v309 = vadd.f32 0.0, %v308
    %v310 = vpop.f32.mrf.mxu0
    %v311 = vadd.f32 0.0, %v310
    %312 = vmatmul.bf16.gmra.mxu0 %v268
    %v313 = vpop.f32.mrf.mxu0
    %v314 = vadd.f32 0.0, %v313
    %v315 = vpop.f32.mrf.mxu0
    %v316 = vadd.f32 0.0, %v315
    %317 = vmatmul.bf16.gmra.mxu0 %v269
    %v318 = vpop.f32.mrf.mxu0
    %v319 = vadd.f32 0.0, %v318
    %v320 = vpop.f32.mrf.mxu0
    %v321 = vadd.f32 0.0, %v320
    %322 = vmatmul.bf16.gmra.mxu0 %v270
    %v323 = vpop.f32.mrf.mxu0
    %v324 = vadd.f32 0.0, %v323
    %v325 = vpop.f32.mrf.mxu0
    %v326 = vadd.f32 0.0, %v325
    %327 = vdwg.mxu0
    %v328 = vadd.f32 %v199, %v289
    %v329 = vadd.f32 %v200, %v291
    %v330 = vadd.f32 %v201, %v294
    %v331 = vadd.f32 %v202, %v296
    %v332 = vadd.f32 %v203, %v299
    %v333 = vadd.f32 %v204, %v301
    %v334 = vadd.f32 %v205, %v304
    %v335 = vadd.f32 %v206, %v306
    %v336 = vadd.f32 %v207, %v309
    %v337 = vadd.f32 %v208, %v311
    %v338 = vadd.f32 %v209, %v314
    %v339 = vadd.f32 %v210, %v316
    %v340 = vadd.f32 %v211, %v319
    %v341 = vadd.f32 %v212, %v321
    %v342 = vadd.f32 %v213, %v324
    %v343 = vadd.f32 %v214, %v326
    %344 = vst [vmem:[#allocation2] sm:$0xff] %v328
    %345 = vst [vmem:[#allocation2 + $0x8] sm:$0xff] %v329
    %346 = vst [vmem:[#allocation2 + $0x10] sm:$0xff] %v330
    %347 = vst [vmem:[#allocation2 + $0x18] sm:$0xff] %v331
    %348 = vst [vmem:[#allocation2 + $0x20] sm:$0xff] %v332
    %349 = vst [vmem:[#allocation2 + $0x28] sm:$0xff] %v333
    %350 = vst [vmem:[#allocation2 + $0x30] sm:$0xff] %v334
    %351 = vst [vmem:[#allocation2 + $0x38] sm:$0xff] %v335
    %352 = vst [vmem:[#allocation2 + $0x40] sm:$0xff] %v336
    %353 = vst [vmem:[#allocation2 + $0x48] sm:$0xff] %v337
    %354 = vst [vmem:[#allocation2 + $0x50] sm:$0xff] %v338
    %355 = vst [vmem:[#allocation2 + $0x58] sm:$0xff] %v339
    %356 = vst [vmem:[#allocation2 + $0x60] sm:$0xff] %v340
    %357 = vst [vmem:[#allocation2 + $0x68] sm:$0xff] %v341
    %358 = vst [vmem:[#allocation2 + $0x70] sm:$0xff] %v342
    %359 = vst [vmem:[#allocation2 + $0x78] sm:$0xff] %v343
    // Predicated region
    $region26: #{tpu_custom_call.1} parent=1 // pred_check
      %p360 = pneg %p26
    $region27: #{tpu_custom_call.1} parent=1 // pred_check_branch
      %362 = sbr.rel (%p360) target = $region29
    $region28: #{tpu_custom_call.1} parent=1 // pred_region
      %v363 = vld [vmem:[#allocation2] sm:$0xff]
      %v364 = vld [vmem:[#allocation2 + $0x8] sm:$0xff]
      %v365 = vld [vmem:[#allocation2 + $0x10] sm:$0xff]
      %v366 = vld [vmem:[#allocation2 + $0x18] sm:$0xff]
      %v367 = vld [vmem:[#allocation2 + $0x20] sm:$0xff]
      %v368 = vld [vmem:[#allocation2 + $0x28] sm:$0xff]
      %v369 = vld [vmem:[#allocation2 + $0x30] sm:$0xff]
      %v370 = vld [vmem:[#allocation2 + $0x38] sm:$0xff]
      %v371 = vld [vmem:[#allocation2 + $0x40] sm:$0xff]
      %v372 = vld [vmem:[#allocation2 + $0x48] sm:$0xff]
      %v373 = vld [vmem:[#allocation2 + $0x50] sm:$0xff]
      %v374 = vld [vmem:[#allocation2 + $0x58] sm:$0xff]
      %v375 = vld [vmem:[#allocation2 + $0x60] sm:$0xff]
      %v376 = vld [vmem:[#allocation2 + $0x68] sm:$0xff]
      %v377 = vld [vmem:[#allocation2 + $0x70] sm:$0xff]
      %v378 = vld [vmem:[#allocation2 + $0x78] sm:$0xff]
      %v379 = vld [vmem:[%s4] sm:$0x1]
      %v381 = vperm.slane %v379, 0
      %v383 = vadd.f32 %v363, %v381
      %v384 = vadd.f32 %v364, %v381
      %v385 = vadd.f32 %v365, %v381
      %v386 = vadd.f32 %v366, %v381
      %v387 = vadd.f32 %v367, %v381
      %v388 = vadd.f32 %v368, %v381
      %v389 = vadd.f32 %v369, %v381
      %v390 = vadd.f32 %v370, %v381
      %v391 = vadd.f32 %v371, %v381
      %v392 = vadd.f32 %v372, %v381
      %v393 = vadd.f32 %v373, %v381
      %v394 = vadd.f32 %v374, %v381
      %v395 = vadd.f32 %v375, %v381
      %v396 = vadd.f32 %v376, %v381
      %v397 = vadd.f32 %v377, %v381
      %v398 = vadd.f32 %v378, %v381
      %399 = vst [vmem:[#allocation2] sm:$0xff] %v383
      %400 = vst [vmem:[#allocation2 + $0x8] sm:$0xff] %v384
      %401 = vst [vmem:[#allocation2 + $0x10] sm:$0xff] %v385
      %402 = vst [vmem:[#allocation2 + $0x18] sm:$0xff] %v386
      %403 = vst [vmem:[#allocation2 + $0x20] sm:$0xff] %v387
      %404 = vst [vmem:[#allocation2 + $0x28] sm:$0xff] %v388
      %405 = vst [vmem:[#allocation2 + $0x30] sm:$0xff] %v389
      %406 = vst [vmem:[#allocation2 + $0x38] sm:$0xff] %v390
      %407 = vst [vmem:[#allocation2 + $0x40] sm:$0xff] %v391
      %408 = vst [vmem:[#allocation2 + $0x48] sm:$0xff] %v392
      %409 = vst [vmem:[#allocation2 + $0x50] sm:$0xff] %v393
      %410 = vst [vmem:[#allocation2 + $0x58] sm:$0xff] %v394
      %411 = vst [vmem:[#allocation2 + $0x60] sm:$0xff] %v395
      %412 = vst [vmem:[#allocation2 + $0x68] sm:$0xff] %v396
      %413 = vst [vmem:[#allocation2 + $0x70] sm:$0xff] %v397
      %414 = vst [vmem:[#allocation2 + $0x78] sm:$0xff] %v398
      %s415 = smul.u32 0, 128
      %v416 = vlaneseq
      %v417 = vshrl.u32 %v416, 7
      %v418 = vadd.s32 %v417, 8
      %v419 = vadd.s32 %v417, 16
      %v420 = vadd.s32 %v417, 24
      %v421 = vadd.s32 %v417, 32
      %v422 = vadd.s32 %v417, 40
      %v423 = vadd.s32 %v417, 48
      %v424 = vadd.s32 %v417, 56
      %v425 = vadd.s32 %v417, 64
      %v426 = vadd.s32 %v417, 72
      %v427 = vadd.s32 %v417, 80
      %v428 = vadd.s32 %v417, 88
      %v429 = vadd.s32 %v417, 96
      %v430 = vadd.s32 %v417, 104
      %v431 = vadd.s32 %v417, 112
      %v432 = vadd.s32 %v417, 120
      %v433 = vstv %s415
      %v434 = vadd.s32 %v433, %v417
      %v435 = vadd.s32 %v433, %v418
      %v436 = vadd.s32 %v433, %v419
      %v437 = vadd.s32 %v433, %v420
      %v438 = vadd.s32 %v433, %v421
      %v439 = vadd.s32 %v433, %v422
      %v440 = vadd.s32 %v433, %v423
      %v441 = vadd.s32 %v433, %v424
      %v442 = vadd.s32 %v433, %v425
      %v443 = vadd.s32 %v433, %v426
      %v444 = vadd.s32 %v433, %v427
      %v445 = vadd.s32 %v433, %v428
      %v446 = vadd.s32 %v433, %v429
      %v447 = vadd.s32 %v433, %v430
      %v448 = vadd.s32 %v433, %v431
      %v449 = vadd.s32 %v433, %v432
      %vm450 = vcmp.lt.s32.totalorder %v434, 16
      %vm451 = vcmp.lt.s32.totalorder %v435, 16
      %vm452 = vcmp.lt.s32.totalorder %v436, 16
      %vm453 = vcmp.lt.s32.totalorder %v437, 16
      %vm454 = vcmp.lt.s32.totalorder %v438, 16
      %vm455 = vcmp.lt.s32.totalorder %v439, 16
      %vm456 = vcmp.lt.s32.totalorder %v440, 16
      %vm457 = vcmp.lt.s32.totalorder %v441, 16
      %vm458 = vcmp.lt.s32.totalorder %v442, 16
      %vm459 = vcmp.lt.s32.totalorder %v443, 16
      %vm460 = vcmp.lt.s32.totalorder %v444, 16
      %vm461 = vcmp.lt.s32.totalorder %v445, 16
      %vm462 = vcmp.lt.s32.totalorder %v446, 16
      %vm463 = vcmp.lt.s32.totalorder %v447, 16
      %vm464 = vcmp.lt.s32.totalorder %v448, 16
      %vm465 = vcmp.lt.s32.totalorder %v449, 16
      %v466 = vsel %vm450, 1, 0
      %v467 = vsel %vm451, 1, 0
      %v468 = vsel %vm452, 1, 0
      %v469 = vsel %vm453, 1, 0
      %v470 = vsel %vm454, 1, 0
      %v471 = vsel %vm455, 1, 0
      %v472 = vsel %vm456, 1, 0
      %v473 = vsel %vm457, 1, 0
      %v474 = vsel %vm458, 1, 0
      %v475 = vsel %vm459, 1, 0
      %v476 = vsel %vm460, 1, 0
      %v477 = vsel %vm461, 1, 0
      %v478 = vsel %vm462, 1, 0
      %v479 = vsel %vm463, 1, 0
      %v480 = vsel %vm464, 1, 0
      %v481 = vsel %vm465, 1, 0
      %vm482 = vcmp.eq.s32.totalorder %v466, 1
      %vm483 = vcmp.eq.s32.totalorder %v467, 1
      %vm484 = vcmp.eq.s32.totalorder %v468, 1
      %vm485 = vcmp.eq.s32.totalorder %v469, 1
      %vm486 = vcmp.eq.s32.totalorder %v470, 1
      %vm487 = vcmp.eq.s32.totalorder %v471, 1
      %vm488 = vcmp.eq.s32.totalorder %v472, 1
      %vm489 = vcmp.eq.s32.totalorder %v473, 1
      %vm490 = vcmp.eq.s32.totalorder %v474, 1
      %vm491 = vcmp.eq.s32.totalorder %v475, 1
      %vm492 = vcmp.eq.s32.totalorder %v476, 1
      %vm493 = vcmp.eq.s32.totalorder %v477, 1
      %vm494 = vcmp.eq.s32.totalorder %v478, 1
      %vm495 = vcmp.eq.s32.totalorder %v479, 1
      %vm496 = vcmp.eq.s32.totalorder %v480, 1
      %vm497 = vcmp.eq.s32.totalorder %v481, 1
      %v498 = vsel %vm482, %v383, 0.0
      %v499 = vsel %vm483, %v384, 0.0
      %v500 = vsel %vm484, %v385, 0.0
      %v501 = vsel %vm485, %v386, 0.0
      %v502 = vsel %vm486, %v387, 0.0
      %v503 = vsel %vm487, %v388, 0.0
      %v504 = vsel %vm488, %v389, 0.0
      %v505 = vsel %vm489, %v390, 0.0
      %v506 = vsel %vm490, %v391, 0.0
      %v507 = vsel %vm491, %v392, 0.0
      %v508 = vsel %vm492, %v393, 0.0
      %v509 = vsel %vm493, %v394, 0.0
      %v510 = vsel %vm494, %v395, 0.0
      %v511 = vsel %vm495, %v396, 0.0
      %v512 = vsel %vm496, %v397, 0.0
      %v513 = vsel %vm497, %v398, 0.0
      %v514 = vadd.f32 %v498, %v499
      %v515 = vadd.f32 %v514, %v500
      %v516 = vadd.f32 %v515, %v501
      %v517 = vadd.f32 %v516, %v502
      %v518 = vadd.f32 %v517, %v503
      %v519 = vadd.f32 %v518, %v504
      %v520 = vadd.f32 %v519, %v505
      %v521 = vadd.f32 %v520, %v506
      %v522 = vadd.f32 %v521, %v507
      %v523 = vadd.f32 %v522, %v508
      %v524 = vadd.f32 %v523, %v509
      %v525 = vadd.f32 %v524, %v510
      %v526 = vadd.f32 %v525, %v511
      %v527 = vadd.f32 %v526, %v512
      %v528 = vadd.f32 %v527, %v513
      %v529 = vrot.slane %v528, 4
      %v530 = vadd.f32 %v528, %v529
      %v531 = vrot.slane %v530, 2
      %v532 = vadd.f32 %v530, %v531
      %v533 = vrot.slane %v532, 1
      %v534 = vadd.f32 %v532, %v533
      %v535 = vmul.f32 %v498, %v498
      %v536 = vmul.f32 %v499, %v499
      %v537 = vmul.f32 %v500, %v500
      %v538 = vmul.f32 %v501, %v501
      %v539 = vmul.f32 %v502, %v502
      %v540 = vmul.f32 %v503, %v503
      %v541 = vmul.f32 %v504, %v504
      %v542 = vmul.f32 %v505, %v505
      %v543 = vmul.f32 %v506, %v506
      %v544 = vmul.f32 %v507, %v507
      %v545 = vmul.f32 %v508, %v508
      %v546 = vmul.f32 %v509, %v509
      %v547 = vmul.f32 %v510, %v510
      %v548 = vmul.f32 %v511, %v511
      %v549 = vmul.f32 %v512, %v512
      %v550 = vmul.f32 %v513, %v513
      %v551 = vadd.f32 %v535, %v536
      %v552 = vadd.f32 %v551, %v537
      %v553 = vadd.f32 %v552, %v538
      %v554 = vadd.f32 %v553, %v539
      %v555 = vadd.f32 %v554, %v540
      %v556 = vadd.f32 %v555, %v541
      %v557 = vadd.f32 %v556, %v542
      %v558 = vadd.f32 %v557, %v543
      %v559 = vadd.f32 %v558, %v544
      %v560 = vadd.f32 %v559, %v545
      %v561 = vadd.f32 %v560, %v546
      %v562 = vadd.f32 %v561, %v547
      %v563 = vadd.f32 %v562, %v548
      %v564 = vadd.f32 %v563, %v549
      %v565 = vadd.f32 %v564, %v550
      %v566 = vrot.slane %v565, 4
      %v567 = vadd.f32 %v565, %v566
      %v568 = vrot.slane %v567, 2
      %v569 = vadd.f32 %v567, %v568
      %v570 = vrot.slane %v569, 1
      %v571 = vadd.f32 %v569, %v570
      %572 = vst [vmem:[#allocation4] sm:$0xff] %v534
      %573 = vst [vmem:[#allocation6] sm:$0xff] %v571
    $region29: #{tpu_custom_call.1} parent=1 // pred_fallthru
      _
    // Predicated region
    $region30: #{tpu_custom_call.1} parent=1 // pred_check
      _
    $region31: #{tpu_custom_call.1} parent=1 // pred_check_branch
      %575 = sbr.rel (0) target = $region33
    $region32: #{tpu_custom_call.1} parent=1 // pred_region
      %577 = vsyncadd [#allocation3], 0
      %s578 = sshll.u32 [#allocation2], 4
      %s579 = int_to_ptr.vmem [resolvable:$true] %s578
      %s580 = sshll.u32 %s5, 4
      %s581 = int_to_ptr.hbm [resolvable:$true] %s580
      %586 = dma.vmem_to_hbm [thread:$0]  %s579, 2048, %s581, [#allocation3], 128, 128, 8
    $region33: #{tpu_custom_call.1} parent=1 // pred_fallthru
      _
    // Predicated region
    $region34: #{tpu_custom_call.1} parent=1 // pred_check
      _
    $region35: #{tpu_custom_call.1} parent=1 // pred_check_branch
      %588 = sbr.rel (0) target = $region37
    $region36: #{tpu_custom_call.1} parent=1 // pred_region
      %590 = vsyncadd [#allocation5], 0
      %s592 = sshll.u32 [#allocation4], 4
      %s593 = int_to_ptr.vmem [resolvable:$true] %s592
      %s594 = sshll.u32 %s6, 4
      %s595 = int_to_ptr.hbm [resolvable:$true] %s594
      %597 = dma.vmem_to_hbm [thread:$0]  %s593, 128, %s595, [#allocation5]
    $region37: #{tpu_custom_call.1} parent=1 // pred_fallthru
      _
    // Predicated region
    $region38: #{tpu_custom_call.1} parent=1 // pred_check
      _
    $region39: #{tpu_custom_call.1} parent=1 // pred_check_branch
      %599 = sbr.rel (0) target = $region41
    $region40: #{tpu_custom_call.1} parent=1 // pred_region
      %601 = vsyncadd [#allocation5], 0
      %s603 = sshll.u32 [#allocation6], 4
      %s604 = int_to_ptr.vmem [resolvable:$true] %s603
      %s605 = sshll.u32 %s7, 4
      %s606 = int_to_ptr.hbm [resolvable:$true] %s605
      %608 = dma.vmem_to_hbm [thread:$0]  %s604, 128, %s606, [#allocation5]
    $region41: #{tpu_custom_call.1} parent=1 // pred_fallthru
      _
    // Predicated region
    $region42: #{tpu_custom_call.1} parent=1 // pred_check
      _
    $region43: #{tpu_custom_call.1} parent=1 // pred_check_branch
      %610 = sbr.rel (0) target = $region45
    $region44: #{tpu_custom_call.1} parent=1 // pred_region
      %612 = dma.done [#allocation3], 2048
    $region45: #{tpu_custom_call.1} parent=1 // pred_fallthru
      _
    // Predicated region
    $region46: #{tpu_custom_call.1} parent=1 // pred_check
      _
    $region47: #{tpu_custom_call.1} parent=1 // pred_check_branch
      %614 = sbr.rel (0) target = $region49
    $region48: #{tpu_custom_call.1} parent=1 // pred_region
      %616 = dma.done [#allocation5], 128
    $region49: #{tpu_custom_call.1} parent=1 // pred_fallthru
      _
    // Predicated region
    $region50: #{tpu_custom_call.1} parent=1 // pred_check
      _
    $region51: #{tpu_custom_call.1} parent=1 // pred_check_branch
      %618 = sbr.rel (0) target = $region53
    $region52: #{tpu_custom_call.1} parent=1 // pred_region
      %620 = dma.done [#allocation5], 128
    $region53: #{tpu_custom_call.1} parent=1 // pred_fallthru
      _
    %621 = vsyncpa [#allocation3], 1
    %622 = vsyncpa [#allocation5], 1

</llo_original>
